<compile_context>
chip_gen: v6e
topology: v6e:2x2x1
jax: 0.10.0
libtpu: 0.0.40
codegen_flags: <defaults>
</compile_context>

<pallas_src>
import jax
import jax.numpy as jnp
from jax.experimental import pallas as pl
from jax.experimental.pallas import tpu as pltpu

STATE_SIZE = 4      # CartPole-v1 observation_space.shape[0]
ACTION_SIZE = 2     # CartPole-v1 action_space.n
HIDDEN = 64
OUT_ROWS = 8        # fc3 output rows padded 2 -> 8 (sublane alignment)
LANE = 128
DEFAULT_TILE_B = 1024   # batch lanes per grid step (review: 1024-2048 is safe)


def _round_up(n, m):
    return ((n + m - 1) // m) * m


def _choose_tiling(batch, tile_b):
    """Pick (tile_lanes, padded_batch) for the batch-in-lanes layout."""
    # Lane-align the batch (batch sits in the lane dimension).
    padded_b = _round_up(max(batch, 1), LANE)
    # Enough steps to keep each tile <= tile_b; force >= 2 steps when it costs
    # no extra padding so v7x's two TensorCores can split the batch axis.
    n_steps = pl.cdiv(padded_b, tile_b)
    if n_steps == 1 and padded_b >= 2 * LANE and padded_b % (2 * LANE) == 0:
        n_steps = 2
    tb = _round_up(pl.cdiv(padded_b, n_steps), LANE)
    return tb, n_steps * tb


def dqn_kernel(x_ref, w1_ref, b1_ref, w2_ref, b2_ref, w3_ref, b3_ref, o_ref):
    # One (STATE_SIZE, tb) batch tile per grid step; weights are VMEM-resident.
    x = x_ref[...]                                            # (4, tb) lane-dense
    h1 = jnp.dot(w1_ref[...], x, preferred_element_type=jnp.float32) + b1_ref[...]
    h1 = jnp.maximum(h1, 0.0)                                 # (64, tb)
    h2 = jnp.dot(w2_ref[...], h1, preferred_element_type=jnp.float32) + b2_ref[...]
    h2 = jnp.maximum(h2, 0.0)                                 # (64, tb)
    # (8, tb) lane-dense store; rows >= ACTION_SIZE are zeros.
    o_ref[...] = (
        jnp.dot(w3_ref[...], h2, preferred_element_type=jnp.float32) + b3_ref[...]
    )


def dqn_forward(x, kernel_params, *, tile_b=DEFAULT_TILE_B):
    """x: (batch, STATE_SIZE) float32; returns (batch, ACTION_SIZE)."""
    w1, b1, w2, b2, w3p, b3p = kernel_params
    batch = x.shape[0]
    tile_b = _round_up(max(tile_b, LANE), LANE)
    tb, padded_b = _choose_tiling(batch, tile_b)

    # Batch-in-lanes input: (STATE_SIZE, padded_b), zero-padded in the lane dim.
    xt = x.T
    if padded_b != batch:
        xt = jnp.pad(xt, ((0, 0), (0, padded_b - batch)))

    grid = (padded_b // tb,)

    flops = 2 * padded_b * (
        STATE_SIZE * HIDDEN + HIDDEN * HIDDEN + HIDDEN * OUT_ROWS
    )
    bytes_accessed = 4 * (
        padded_b * STATE_SIZE                 # x in
        + padded_b * OUT_ROWS                 # out
        + HIDDEN * STATE_SIZE + HIDDEN        # fc1
        + HIDDEN * HIDDEN + HIDDEN            # fc2
        + OUT_ROWS * HIDDEN + OUT_ROWS        # fc3 (padded)
    )

    out = pl.pallas_call(
        dqn_kernel,
        out_shape=jax.ShapeDtypeStruct((OUT_ROWS, padded_b), jnp.float32),
        grid_spec=pltpu.PrefetchScalarGridSpec(
            num_scalar_prefetch=0,
            grid=grid,
            in_specs=[
                # x: tiled over the batch (lane) axis
                pl.BlockSpec((STATE_SIZE, tb), lambda i: (0, i)),
                # weights / biases: same block every step -> VMEM-resident
                pl.BlockSpec((HIDDEN, STATE_SIZE), lambda i: (0, 0)),
                pl.BlockSpec((HIDDEN, 1), lambda i: (0, 0)),
                pl.BlockSpec((HIDDEN, HIDDEN), lambda i: (0, 0)),
                pl.BlockSpec((HIDDEN, 1), lambda i: (0, 0)),
                pl.BlockSpec((OUT_ROWS, HIDDEN), lambda i: (0, 0)),
                pl.BlockSpec((OUT_ROWS, 1), lambda i: (0, 0)),
            ],
            out_specs=pl.BlockSpec((OUT_ROWS, tb), lambda i: (0, i)),
        ),
        compiler_params=pltpu.CompilerParams(
            dimension_semantics=("parallel",),
        ),
        cost_estimate=pl.CostEstimate(
            flops=flops, transcendentals=0, bytes_accessed=bytes_accessed
        ),
    )(xt, w1, b1, w2, b2, w3p, b3p)

    # Strip the 6 zero output rows and the lane padding; return (batch, 2).
    return out[:ACTION_SIZE, :batch].T


def init_params(key):
    # PyTorch nn.Linear layout: W (out_features, in_features), b (out_features,)
    # init: U(-1/sqrt(fan_in), 1/sqrt(fan_in))
    def linear(key, fan_in, fan_out):
        kw, kb = jax.random.split(key)
        bound = 1.0 / (fan_in ** 0.5)
        w = jax.random.uniform(kw, (fan_out, fan_in), jnp.float32, -bound, bound)
        b = jax.random.uniform(kb, (fan_out,), jnp.float32, -bound, bound)
        return w, b

    k1, k2, k3 = jax.random.split(key, 3)
    w1, b1 = linear(k1, STATE_SIZE, HIDDEN)
    w2, b2 = linear(k2, HIDDEN, HIDDEN)
    w3, b3 = linear(k3, HIDDEN, ACTION_SIZE)
    return (w1, b1, w2, b2, w3, b3)


def prepare_params(params):
    """One-time conversion to kernel layout (hoisted out of the per-call path):
    biases become (out, 1) columns; fc3 is zero-padded to OUT_ROWS sublanes."""
    w1, b1, w2, b2, w3, b3 = params
    w3p = jnp.zeros((OUT_ROWS, HIDDEN), jnp.float32).at[:ACTION_SIZE, :].set(w3)
    b3p = jnp.zeros((OUT_ROWS, 1), jnp.float32).at[:ACTION_SIZE, 0].set(b3)
    return (w1, b1.reshape(HIDDEN, 1), w2, b2.reshape(HIDDEN, 1), w3p, b3p)


def reference_forward(x, params):
    w1, b1, w2, b2, w3, b3 = params
    h1 = jnp.maximum(x @ w1.T + b1, 0.0)
    h2 = jnp.maximum(h1 @ w2.T + b2, 0.0)
    return h2 @ w3.T + b3


if __name__ == "__main__":
    key = jax.random.PRNGKey(0)
    kx, kp = jax.random.split(key)
    params = init_params(kp)
    kernel_params = prepare_params(params)   # hoisted: pad/reshape once

    ok = True
    # Small shapes: sublane-aligned, ragged (exercises lane padding), a
    # non-multiple-of-128 medium batch, and a multiple-of-256 batch that
    # exercises the 2-step grid path.
    for batch in (8, 5, 300, 512):
        x = jax.random.normal(
            jax.random.fold_in(kx, batch), (batch, STATE_SIZE), dtype=jnp.float32
        )
        out = jax.block_until_ready(dqn_forward(x, kernel_params))
        ref = reference_forward(x, params)
        ok &= out.shape == (batch, ACTION_SIZE)
        ok &= bool(jnp.allclose(out, ref, atol=1e-5, rtol=1e-5))

    assert ok
    print("KERNEL_OK")
</pallas_src>

<mosaic_0001>
module attributes {stable_mosaic.version = 11 : i64} {
  func.func @dqn_kernel(%arg0: i32, %arg1: memref<4x128xf32, #tpu.memory_space<vmem>>, %arg2: memref<64x4xf32, #tpu.memory_space<vmem>>, %arg3: memref<64x1xf32, #tpu.memory_space<vmem>>, %arg4: memref<64x64xf32, #tpu.memory_space<vmem>>, %arg5: memref<64x1xf32, #tpu.memory_space<vmem>>, %arg6: memref<8x64xf32, #tpu.memory_space<vmem>>, %arg7: memref<8x1xf32, #tpu.memory_space<vmem>>, %arg8: memref<8x128xf32, #tpu.memory_space<vmem>>) attributes {dimension_semantics = [#tpu.dimension_semantics<parallel>], iteration_bounds = array<i64: 1>, scalar_prefetch = 0 : i64, scratch_operands = 0 : i64, tpu.core_type = #tpu.core_type<tc>, window_params = [{transform_indices = @transform_0, window_bounds = array<i64: 4, 128>}, {pipeline_mode = #tpu.pipeline_mode<synchronous>, transform_indices = @transform_1, window_bounds = array<i64: 64, 4>}, {pipeline_mode = #tpu.pipeline_mode<synchronous>, transform_indices = @transform_2, window_bounds = array<i64: 64, 1>}, {pipeline_mode = #tpu.pipeline_mode<synchronous>, transform_indices = @transform_3, window_bounds = array<i64: 64, 64>}, {pipeline_mode = #tpu.pipeline_mode<synchronous>, transform_indices = @transform_4, window_bounds = array<i64: 64, 1>}, {pipeline_mode = #tpu.pipeline_mode<synchronous>, transform_indices = @transform_5, window_bounds = array<i64: 8, 64>}, {pipeline_mode = #tpu.pipeline_mode<synchronous>, transform_indices = @transform_6, window_bounds = array<i64: 8, 1>}, {transform_indices = @transform_7, window_bounds = array<i64: 8, 128>}]} {
    %c0 = arith.constant 0 : index
    %c0_0 = arith.constant 0 : index
    %0 = vector.load %arg1[%c0, %c0_0] : memref<4x128xf32, #tpu.memory_space<vmem>>, vector<4x128xf32>
    %c0_1 = arith.constant 0 : index
    %c0_2 = arith.constant 0 : index
    %1 = vector.load %arg2[%c0_1, %c0_2] : memref<64x4xf32, #tpu.memory_space<vmem>>, vector<64x4xf32>
    %cst = arith.constant dense<0.000000e+00> : vector<64x128xf32>
    %2 = tpu.matmul %1, %0, %cst {dimension_numbers = #tpu.dot_dimension_numbers<[1], [0], [0], [1], [0, 0, 1, 1], [], []>} : vector<64x4xf32>, vector<4x128xf32>, vector<64x128xf32> -> vector<64x128xf32>
    %c0_3 = arith.constant 0 : index
    %c0_4 = arith.constant 0 : index
    %3 = vector.load %arg3[%c0_3, %c0_4] : memref<64x1xf32, #tpu.memory_space<vmem>>, vector<64x1xf32>
    %4 = vector.broadcast %3 : vector<64x1xf32> to vector<64x128xf32>
    %5 = arith.addf %2, %4 : vector<64x128xf32>
    %cst_5 = arith.constant 0.000000e+00 : f32
    %6 = vector.broadcast %cst_5 : f32 to vector<64x128xf32>
    %7 = arith.maximumf %5, %6 : vector<64x128xf32>
    %c0_6 = arith.constant 0 : index
    %c0_7 = arith.constant 0 : index
    %8 = vector.load %arg4[%c0_6, %c0_7] : memref<64x64xf32, #tpu.memory_space<vmem>>, vector<64x64xf32>
    %cst_8 = arith.constant dense<0.000000e+00> : vector<64x128xf32>
    %9 = tpu.matmul %8, %7, %cst_8 {dimension_numbers = #tpu.dot_dimension_numbers<[1], [0], [0], [1], [0, 0, 1, 1], [], []>} : vector<64x64xf32>, vector<64x128xf32>, vector<64x128xf32> -> vector<64x128xf32>
    %c0_9 = arith.constant 0 : index
    %c0_10 = arith.constant 0 : index
    %10 = vector.load %arg5[%c0_9, %c0_10] : memref<64x1xf32, #tpu.memory_space<vmem>>, vector<64x1xf32>
    %11 = vector.broadcast %10 : vector<64x1xf32> to vector<64x128xf32>
    %12 = arith.addf %9, %11 : vector<64x128xf32>
    %cst_11 = arith.constant 0.000000e+00 : f32
    %13 = vector.broadcast %cst_11 : f32 to vector<64x128xf32>
    %14 = arith.maximumf %12, %13 : vector<64x128xf32>
    %c0_12 = arith.constant 0 : index
    %c0_13 = arith.constant 0 : index
    %15 = vector.load %arg6[%c0_12, %c0_13] : memref<8x64xf32, #tpu.memory_space<vmem>>, vector<8x64xf32>
    %cst_14 = arith.constant dense<0.000000e+00> : vector<8x128xf32>
    %16 = tpu.matmul %15, %14, %cst_14 {dimension_numbers = #tpu.dot_dimension_numbers<[1], [0], [0], [1], [0, 0, 1, 1], [], []>} : vector<8x64xf32>, vector<64x128xf32>, vector<8x128xf32> -> vector<8x128xf32>
    %c0_15 = arith.constant 0 : index
    %c0_16 = arith.constant 0 : index
    %17 = vector.load %arg7[%c0_15, %c0_16] : memref<8x1xf32, #tpu.memory_space<vmem>>, vector<8x1xf32>
    %18 = vector.broadcast %17 : vector<8x1xf32> to vector<8x128xf32>
    %19 = arith.addf %16, %18 : vector<8x128xf32>
    %c0_17 = arith.constant 0 : index
    %c0_18 = arith.constant 0 : index
    %20 = vector.load %arg8[%c0_17, %c0_18] : memref<8x128xf32, #tpu.memory_space<vmem>>, vector<8x128xf32>
    tpu.vector_store %arg8[%c0_17, %c0_18], %19 {strides = array<i32>} : memref<8x128xf32, #tpu.memory_space<vmem>>, vector<8x128xf32>,
    return
  }
  func.func @transform_0(%arg0: i32) -> (i32, i32) {
    %c0_i32 = arith.constant 0 : i32
    %c0_i32_0 = arith.constant 0 : i32
    return %c0_i32, %arg0 : i32, i32
  }
  func.func @transform_1(%arg0: i32) -> (i32, i32) {
    %c0_i32 = arith.constant 0 : i32
    %c0_i32_0 = arith.constant 0 : i32
    %c0_i32_1 = arith.constant 0 : i32
    return %c0_i32, %c0_i32_0 : i32, i32
  }
  func.func @transform_2(%arg0: i32) -> (i32, i32) {
    %c0_i32 = arith.constant 0 : i32
    %c0_i32_0 = arith.constant 0 : i32
    %c0_i32_1 = arith.constant 0 : i32
    return %c0_i32, %c0_i32_0 : i32, i32
  }
  func.func @transform_3(%arg0: i32) -> (i32, i32) {
    %c0_i32 = arith.constant 0 : i32
    %c0_i32_0 = arith.constant 0 : i32
    %c0_i32_1 = arith.constant 0 : i32
    return %c0_i32, %c0_i32_0 : i32, i32
  }
  func.func @transform_4(%arg0: i32) -> (i32, i32) {
    %c0_i32 = arith.constant 0 : i32
    %c0_i32_0 = arith.constant 0 : i32
    %c0_i32_1 = arith.constant 0 : i32
    return %c0_i32, %c0_i32_0 : i32, i32
  }
  func.func @transform_5(%arg0: i32) -> (i32, i32) {
    %c0_i32 = arith.constant 0 : i32
    %c0_i32_0 = arith.constant 0 : i32
    %c0_i32_1 = arith.constant 0 : i32
    return %c0_i32, %c0_i32_0 : i32, i32
  }
  func.func @transform_6(%arg0: i32) -> (i32, i32) {
    %c0_i32 = arith.constant 0 : i32
    %c0_i32_0 = arith.constant 0 : i32
    %c0_i32_1 = arith.constant 0 : i32
    return %c0_i32, %c0_i32_0 : i32, i32
  }
  func.func @transform_7(%arg0: i32) -> (i32, i32) {
    %c0_i32 = arith.constant 0 : i32
    %c0_i32_0 = arith.constant 0 : i32
    return %c0_i32, %arg0 : i32, i32
  }
}

</mosaic_0001>

<llo_original>
// kernel: tpu_custom_call.1
$region0: #{tpu_custom_call.1}
  #allocation0 [shape = 'u32[]', space=smem, size = 0x4, offset = 0x4, fixed_abs, tag = 'smem constant byte address 0x4 - core index']
  #allocation1 [shape = 'u32[144,128]{1,0:T(1,128)}', space=vmem, size = 0x12000, scoped, tag = 'internal scratch']
  %s0 = inlined_call_operand.vmem [shape: f32[4,128], index: 0, kind: input, shape index: {}]
  %s1 = inlined_call_operand.vmem [shape: f32[64,4], index: 1, kind: input, shape index: {}]
  %s2 = inlined_call_operand.vmem [shape: f32[64,1], index: 2, kind: input, shape index: {}]
  %s3 = inlined_call_operand.vmem [shape: f32[64,64], index: 3, kind: input, shape index: {}]
  %s4 = inlined_call_operand.vmem [shape: f32[64,1], index: 4, kind: input, shape index: {}]
  %s5 = inlined_call_operand.vmem [shape: f32[8,64], index: 5, kind: input, shape index: {}]
  %s6 = inlined_call_operand.vmem [shape: f32[8,1], index: 6, kind: input, shape index: {}]
  %s7 = inlined_call_operand.hbm [shape: f32[8,128], index: 7, kind: output, shape index: {}]
  %s8 = sld [smem:[#allocation0]]
  $region38: #{tpu_custom_call.1} parent=0
    _
  %s10 = ssub.s32 1, %s8
  %s11 = scalar_select 0, %s10, %s8
  $region1: #{tpu_custom_call.1} parent=0
    #allocation2 [shape = 'u8[4096]{0}', space=vmem, size = 0x1000, scoped, tag = 'output window, operand 0, single buffered']
    #allocation3 [shape = 's32[1]{0}', space=sflag, size = 0x4, scoped, tag = 'scoped memory for tpu_custom_call.1']
    %12 = vsyncpa [#allocation3], 0
    // Predicated region
    $region2: #{tpu_custom_call.1} parent=1 // pred_check
      _
    $region3: #{tpu_custom_call.1} parent=1 // pred_check_branch
      %14 = sbr.rel (0) target = $region5
    $region4: #{tpu_custom_call.1} parent=1 // pred_region
      _
    $region5: #{tpu_custom_call.1} parent=1 // pred_fallthru
      _
    // Predicated region
    $region6: #{tpu_custom_call.1} parent=1 // pred_check
      _
    $region7: #{tpu_custom_call.1} parent=1 // pred_check_branch
      %16 = sbr.rel (0) target = $region9
    $region8: #{tpu_custom_call.1} parent=1 // pred_region
      _
    $region9: #{tpu_custom_call.1} parent=1 // pred_fallthru
      _
    // Predicated region
    $region10: #{tpu_custom_call.1} parent=1 // pred_check
      _
    $region11: #{tpu_custom_call.1} parent=1 // pred_check_branch
      %18 = sbr.rel (0) target = $region13
    $region12: #{tpu_custom_call.1} parent=1 // pred_region
      _
    $region13: #{tpu_custom_call.1} parent=1 // pred_fallthru
      _
    // Predicated region
    $region14: #{tpu_custom_call.1} parent=1 // pred_check
      _
    $region15: #{tpu_custom_call.1} parent=1 // pred_check_branch
      %20 = sbr.rel (0) target = $region17
    $region16: #{tpu_custom_call.1} parent=1 // pred_region
      _
    $region17: #{tpu_custom_call.1} parent=1 // pred_fallthru
      _
    // Predicated region
    $region18: #{tpu_custom_call.1} parent=1 // pred_check
      _
    $region19: #{tpu_custom_call.1} parent=1 // pred_check_branch
      %22 = sbr.rel (0) target = $region21
    $region20: #{tpu_custom_call.1} parent=1 // pred_region
      _
    $region21: #{tpu_custom_call.1} parent=1 // pred_fallthru
      _
    // Predicated region
    $region22: #{tpu_custom_call.1} parent=1 // pred_check
      _
    $region23: #{tpu_custom_call.1} parent=1 // pred_check_branch
      %24 = sbr.rel (0) target = $region25
    $region24: #{tpu_custom_call.1} parent=1 // pred_region
      _
    $region25: #{tpu_custom_call.1} parent=1 // pred_fallthru
      _
    // Predicated region
    $region26: #{tpu_custom_call.1} parent=1 // pred_check
      _
    $region27: #{tpu_custom_call.1} parent=1 // pred_check_branch
      %26 = sbr.rel (0) target = $region29
    $region28: #{tpu_custom_call.1} parent=1 // pred_region
      _
    $region29: #{tpu_custom_call.1} parent=1 // pred_fallthru
      _
    %v27 = vld [vmem:[%s0] sm:$0xf]
    %v28 = vld [vmem:[%s1] sm:$0xff]
    %v29 = vld [vmem:[%s1 + $0x8] sm:$0xff]
    %v30 = vld [vmem:[%s1 + $0x10] sm:$0xff]
    %v31 = vld [vmem:[%s1 + $0x18] sm:$0xff]
    %v32 = vld [vmem:[%s1 + $0x20] sm:$0xff]
    %v33 = vld [vmem:[%s1 + $0x28] sm:$0xff]
    %v34 = vld [vmem:[%s1 + $0x30] sm:$0xff]
    %v35 = vld [vmem:[%s1 + $0x38] sm:$0xff]
    %v36 = vld [vmem:[%s2] sm:$0xff]
    %v37 = vld [vmem:[%s2 + $0x8] sm:$0xff]
    %v38 = vld [vmem:[%s2 + $0x10] sm:$0xff]
    %v39 = vld [vmem:[%s2 + $0x18] sm:$0xff]
    %v40 = vld [vmem:[%s2 + $0x20] sm:$0xff]
    %v41 = vld [vmem:[%s2 + $0x28] sm:$0xff]
    %v42 = vld [vmem:[%s2 + $0x30] sm:$0xff]
    %v43 = vld [vmem:[%s2 + $0x38] sm:$0xff]
    %45 = vset.pattern.permute.xlu0 0
    %46 = vperm.xlu0 %45, %v36
    %v47 = vpop.permute.xlu0 %46
    %50 = vset.pattern.permute.xlu0 0
    %51 = vperm.xlu0 %50, %v37
    %v52 = vpop.permute.xlu0 %51
    %55 = vset.pattern.permute.xlu0 0
    %56 = vperm.xlu0 %55, %v38
    %v57 = vpop.permute.xlu0 %56
    %60 = vset.pattern.permute.xlu0 0
    %61 = vperm.xlu0 %60, %v39
    %v62 = vpop.permute.xlu0 %61
    %65 = vset.pattern.permute.xlu0 0
    %66 = vperm.xlu0 %65, %v40
    %v67 = vpop.permute.xlu0 %66
    %70 = vset.pattern.permute.xlu0 0
    %71 = vperm.xlu0 %70, %v41
    %v72 = vpop.permute.xlu0 %71
    %75 = vset.pattern.permute.xlu0 0
    %76 = vperm.xlu0 %75, %v42
    %v77 = vpop.permute.xlu0 %76
    %80 = vset.pattern.permute.xlu0 0
    %81 = vperm.xlu0 %80, %v43
    %v82 = vpop.permute.xlu0 %81
    %vm84 = vcmask 31744
    %v86 = vsel %vm84, %v28, 0
    %v89 = vsel %vm84, %v29, 0
    %v92 = vsel %vm84, %v30, 0
    %v95 = vsel %vm84, %v31, 0
    %v98 = vsel %vm84, %v32, 0
    %v101 = vsel %vm84, %v33, 0
    %v104 = vsel %vm84, %v34, 0
    %v107 = vsel %vm84, %v35, 0
    %vm109 = vcmask 1043456
    %v111 = vsel %vm109, %v27, 0
    %113 = vmatprep.subr.mxu0 0.0
    %114 = vmatpush1.msra.mxu0 0.0
    %115 = vmatprep.subr.mxu0 0.0
    %116 = vmatpush1.msra.mxu0 0.0
    %117 = vmatprep.subr.mxu0 0.0
    %118 = vmatpush1.msra.mxu0 0.0
    %119 = vmatprep.subr.mxu0 0.0
    %120 = vmatpush1.msra.mxu0 0.0
    %121 = vmatprep.subr.mxu0 0.0
    %122 = vmatpush1.msra.mxu0 0.0
    %123 = vmatprep.subr.mxu0 0.0
    %124 = vmatpush1.msra.mxu0 0.0
    %125 = vmatprep.subr.mxu0 0.0
    %126 = vmatpush1.msra.mxu0 0.0
    %127 = vmatprep.subr.mxu0 0.0
    %128 = vmatpush1.msra.mxu0 0.0
    %129 = vmatprep.subr.mxu0 0.0
    %130 = vmatpush1.msra.mxu0 0.0
    %131 = vmatprep.subr.mxu0 0.0
    %132 = vmatpush1.msra.mxu0 0.0
    %133 = vmatprep.subr.mxu0 0.0
    %134 = vmatpush1.msra.mxu0 0.0
    %135 = vmatprep.subr.mxu0 0.0
    %136 = vmatpush1.msra.mxu0 0.0
    %137 = vmatprep.subr.mxu0 0.0
    %138 = vmatpush1.msra.mxu0 0.0
    %139 = vmatprep.subr.mxu0 0.0
    %140 = vmatpush1.msra.mxu0 0.0
    %141 = vmatprep.subr.mxu0 0.0
    %142 = vmatpush1.msra.mxu0 0.0
    %143 = vmatprep.subr.mxu0 0.0
    %144 = vmatpush1.msra.mxu0 %v111
    %145 = vmatprep.subr.mxu0 0.0
    %146 = vmatpush2.msra.mxu0 0.0
    %147 = vmatprep.subr.mxu0 0.0
    %148 = vmatpush2.msra.mxu0 0.0
    %149 = vmatprep.subr.mxu0 0.0
    %150 = vmatpush2.msra.mxu0 0.0
    %151 = vmatprep.subr.mxu0 0.0
    %152 = vmatpush2.msra.mxu0 0.0
    %153 = vmatprep.subr.mxu0 0.0
    %154 = vmatpush2.msra.mxu0 0.0
    %155 = vmatprep.subr.mxu0 0.0
    %156 = vmatpush2.msra.mxu0 0.0
    %157 = vmatprep.subr.mxu0 0.0
    %158 = vmatpush2.msra.mxu0 0.0
    %159 = vmatprep.subr.mxu0 0.0
    %160 = vmatpush2.msra.mxu0 0.0
    %161 = vmatprep.subr.mxu0 0.0
    %162 = vmatpush2.msra.mxu0 0.0
    %163 = vmatprep.subr.mxu0 0.0
    %164 = vmatpush2.msra.mxu0 0.0
    %165 = vmatprep.subr.mxu0 0.0
    %166 = vmatpush2.msra.mxu0 0.0
    %167 = vmatprep.subr.mxu0 0.0
    %168 = vmatpush2.msra.mxu0 0.0
    %169 = vmatprep.subr.mxu0 0.0
    %170 = vmatpush2.msra.mxu0 0.0
    %171 = vmatprep.subr.mxu0 0.0
    %172 = vmatpush2.msra.mxu0 0.0
    %173 = vmatprep.subr.mxu0 0.0
    %174 = vmatpush2.msra.mxu0 0.0
    %175 = vmatprep.subr.mxu0 0.0
    %176 = vmatpush2.msra.mxu0 0.0
    %177 = vmatprep.mubr.f32.mxu0 0.0
    %178 = vmatmul.mubr.f32.gmra.mxu0 %v86
    %v179 = vpop.f32.mrf.mxu0
    %v180 = vadd.f32 %v47, %v179
    %v181 = vpop.f32.mrf.mxu0
    %182 = vmatprep.mubr.f32.mxu0 0.0
    %183 = vmatmul.mubr.f32.gmra.mxu0 %v89
    %v184 = vpop.f32.mrf.mxu0
    %v185 = vadd.f32 %v52, %v184
    %v186 = vpop.f32.mrf.mxu0
    %187 = vmatprep.mubr.f32.mxu0 0.0
    %188 = vmatmul.mubr.f32.gmra.mxu0 %v92
    %v189 = vpop.f32.mrf.mxu0
    %v190 = vadd.f32 %v57, %v189
    %v191 = vpop.f32.mrf.mxu0
    %192 = vmatprep.mubr.f32.mxu0 0.0
    %193 = vmatmul.mubr.f32.gmra.mxu0 %v95
    %v194 = vpop.f32.mrf.mxu0
    %v195 = vadd.f32 %v62, %v194
    %v196 = vpop.f32.mrf.mxu0
    %197 = vmatprep.mubr.f32.mxu0 0.0
    %198 = vmatmul.mubr.f32.gmra.mxu0 %v98
    %v199 = vpop.f32.mrf.mxu0
    %v200 = vadd.f32 %v67, %v199
    %v201 = vpop.f32.mrf.mxu0
    %202 = vmatprep.mubr.f32.mxu0 0.0
    %203 = vmatmul.mubr.f32.gmra.mxu0 %v101
    %v204 = vpop.f32.mrf.mxu0
    %v205 = vadd.f32 %v72, %v204
    %v206 = vpop.f32.mrf.mxu0
    %207 = vmatprep.mubr.f32.mxu0 0.0
    %208 = vmatmul.mubr.f32.gmra.mxu0 %v104
    %v209 = vpop.f32.mrf.mxu0
    %v210 = vadd.f32 %v77, %v209
    %v211 = vpop.f32.mrf.mxu0
    %212 = vmatprep.mubr.f32.mxu0 0.0
    %213 = vmatmul.mubr.f32.gmra.mxu0 %v107
    %v214 = vpop.f32.mrf.mxu0
    %v215 = vadd.f32 %v82, %v214
    %v216 = vpop.f32.mrf.mxu0
    %217 = vdwg.mxu0
    %v218 = vmax.f32 %v180, 0.0
    %v219 = vmax.f32 %v185, 0.0
    %v220 = vmax.f32 %v190, 0.0
    %v221 = vmax.f32 %v195, 0.0
    %v222 = vmax.f32 %v200, 0.0
    %v223 = vmax.f32 %v205, 0.0
    %v224 = vmax.f32 %v210, 0.0
    %v225 = vmax.f32 %v215, 0.0
    %v226 = vld [vmem:[%s3] sm:$0xff]
    %v227 = vld [vmem:[%s3 + $0x8] sm:$0xff]
    %v228 = vld [vmem:[%s3 + $0x10] sm:$0xff]
    %v229 = vld [vmem:[%s3 + $0x18] sm:$0xff]
    %v230 = vld [vmem:[%s3 + $0x20] sm:$0xff]
    %v231 = vld [vmem:[%s3 + $0x28] sm:$0xff]
    %v232 = vld [vmem:[%s3 + $0x30] sm:$0xff]
    %v233 = vld [vmem:[%s3 + $0x38] sm:$0xff]
    %v234 = vld [vmem:[%s4] sm:$0xff]
    %v235 = vld [vmem:[%s4 + $0x8] sm:$0xff]
    %v236 = vld [vmem:[%s4 + $0x10] sm:$0xff]
    %v237 = vld [vmem:[%s4 + $0x18] sm:$0xff]
    %v238 = vld [vmem:[%s4 + $0x20] sm:$0xff]
    %v239 = vld [vmem:[%s4 + $0x28] sm:$0xff]
    %v240 = vld [vmem:[%s4 + $0x30] sm:$0xff]
    %v241 = vld [vmem:[%s4 + $0x38] sm:$0xff]
    %243 = vset.pattern.permute.xlu0 0
    %244 = vperm.xlu0 %243, %v234
    %v245 = vpop.permute.xlu0 %244
    %248 = vset.pattern.permute.xlu0 0
    %249 = vperm.xlu0 %248, %v235
    %v250 = vpop.permute.xlu0 %249
    %253 = vset.pattern.permute.xlu0 0
    %254 = vperm.xlu0 %253, %v236
    %v255 = vpop.permute.xlu0 %254
    %258 = vset.pattern.permute.xlu0 0
    %259 = vperm.xlu0 %258, %v237
    %v260 = vpop.permute.xlu0 %259
    %263 = vset.pattern.permute.xlu0 0
    %264 = vperm.xlu0 %263, %v238
    %v265 = vpop.permute.xlu0 %264
    %268 = vset.pattern.permute.xlu0 0
    %269 = vperm.xlu0 %268, %v239
    %v270 = vpop.permute.xlu0 %269
    %273 = vset.pattern.permute.xlu0 0
    %274 = vperm.xlu0 %273, %v240
    %v275 = vpop.permute.xlu0 %274
    %278 = vset.pattern.permute.xlu0 0
    %279 = vperm.xlu0 %278, %v241
    %v280 = vpop.permute.xlu0 %279
    %vm282 = vcmask 523264
    %v284 = vsel %vm282, %v226, 0
    %v287 = vsel %vm282, %v227, 0
    %v290 = vsel %vm282, %v228, 0
    %v293 = vsel %vm282, %v229, 0
    %v296 = vsel %vm282, %v230, 0
    %v299 = vsel %vm282, %v231, 0
    %v302 = vsel %vm282, %v232, 0
    %v305 = vsel %vm282, %v233, 0
    %307 = vmatprep.subr.mxu0 0.0
    %308 = vmatpush1.msra.mxu0 0.0
    %309 = vmatprep.subr.mxu0 0.0
    %310 = vmatpush1.msra.mxu0 0.0
    %311 = vmatprep.subr.mxu0 0.0
    %312 = vmatpush1.msra.mxu0 0.0
    %313 = vmatprep.subr.mxu0 0.0
    %314 = vmatpush1.msra.mxu0 0.0
    %315 = vmatprep.subr.mxu0 0.0
    %316 = vmatpush1.msra.mxu0 0.0
    %317 = vmatprep.subr.mxu0 0.0
    %318 = vmatpush1.msra.mxu0 0.0
    %319 = vmatprep.subr.mxu0 0.0
    %320 = vmatpush1.msra.mxu0 0.0
    %321 = vmatprep.subr.mxu0 0.0
    %322 = vmatpush1.msra.mxu0 0.0
    %323 = vmatprep.subr.mxu0 0.0
    %324 = vmatpush1.msra.mxu0 %v225
    %325 = vmatprep.subr.mxu0 0.0
    %326 = vmatpush1.msra.mxu0 %v224
    %327 = vmatprep.subr.mxu0 0.0
    %328 = vmatpush1.msra.mxu0 %v223
    %329 = vmatprep.subr.mxu0 0.0
    %330 = vmatpush1.msra.mxu0 %v222
    %331 = vmatprep.subr.mxu0 0.0
    %332 = vmatpush1.msra.mxu0 %v221
    %333 = vmatprep.subr.mxu0 0.0
    %334 = vmatpush1.msra.mxu0 %v220
    %335 = vmatprep.subr.mxu0 0.0
    %336 = vmatpush1.msra.mxu0 %v219
    %337 = vmatprep.subr.mxu0 0.0
    %338 = vmatpush1.msra.mxu0 %v218
    %339 = vmatprep.subr.mxu0 0.0
    %340 = vmatpush2.msra.mxu0 0.0
    %341 = vmatprep.subr.mxu0 0.0
    %342 = vmatpush2.msra.mxu0 0.0
    %343 = vmatprep.subr.mxu0 0.0
    %344 = vmatpush2.msra.mxu0 0.0
    %345 = vmatprep.subr.mxu0 0.0
    %346 = vmatpush2.msra.mxu0 0.0
    %347 = vmatprep.subr.mxu0 0.0
    %348 = vmatpush2.msra.mxu0 0.0
    %349 = vmatprep.subr.mxu0 0.0
    %350 = vmatpush2.msra.mxu0 0.0
    %351 = vmatprep.subr.mxu0 0.0
    %352 = vmatpush2.msra.mxu0 0.0
    %353 = vmatprep.subr.mxu0 0.0
    %354 = vmatpush2.msra.mxu0 0.0
    %355 = vmatprep.subr.mxu0 0.0
    %356 = vmatpush2.msra.mxu0 0.0
    %357 = vmatprep.subr.mxu0 0.0
    %358 = vmatpush2.msra.mxu0 0.0
    %359 = vmatprep.subr.mxu0 0.0
    %360 = vmatpush2.msra.mxu0 0.0
    %361 = vmatprep.subr.mxu0 0.0
    %362 = vmatpush2.msra.mxu0 0.0
    %363 = vmatprep.subr.mxu0 0.0
    %364 = vmatpush2.msra.mxu0 0.0
    %365 = vmatprep.subr.mxu0 0.0
    %366 = vmatpush2.msra.mxu0 0.0
    %367 = vmatprep.subr.mxu0 0.0
    %368 = vmatpush2.msra.mxu0 0.0
    %369 = vmatprep.subr.mxu0 0.0
    %370 = vmatpush2.msra.mxu0 0.0
    %371 = vmatprep.mubr.f32.mxu0 0.0
    %372 = vmatmul.mubr.f32.gmra.mxu0 %v284
    %v373 = vpop.f32.mrf.mxu0
    %v374 = vadd.f32 %v245, %v373
    %v375 = vpop.f32.mrf.mxu0
    %376 = vmatprep.mubr.f32.mxu0 0.0
    %377 = vmatmul.mubr.f32.gmra.mxu0 %v287
    %v378 = vpop.f32.mrf.mxu0
    %v379 = vadd.f32 %v250, %v378
    %v380 = vpop.f32.mrf.mxu0
    %381 = vmatprep.mubr.f32.mxu0 0.0
    %382 = vmatmul.mubr.f32.gmra.mxu0 %v290
    %v383 = vpop.f32.mrf.mxu0
    %v384 = vadd.f32 %v255, %v383
    %v385 = vpop.f32.mrf.mxu0
    %386 = vmatprep.mubr.f32.mxu0 0.0
    %387 = vmatmul.mubr.f32.gmra.mxu0 %v293
    %v388 = vpop.f32.mrf.mxu0
    %v389 = vadd.f32 %v260, %v388
    %v390 = vpop.f32.mrf.mxu0
    %391 = vmatprep.mubr.f32.mxu0 0.0
    %392 = vmatmul.mubr.f32.gmra.mxu0 %v296
    %v393 = vpop.f32.mrf.mxu0
    %v394 = vadd.f32 %v265, %v393
    %v395 = vpop.f32.mrf.mxu0
    %396 = vmatprep.mubr.f32.mxu0 0.0
    %397 = vmatmul.mubr.f32.gmra.mxu0 %v299
    %v398 = vpop.f32.mrf.mxu0
    %v399 = vadd.f32 %v270, %v398
    %v400 = vpop.f32.mrf.mxu0
    %401 = vmatprep.mubr.f32.mxu0 0.0
    %402 = vmatmul.mubr.f32.gmra.mxu0 %v302
    %v403 = vpop.f32.mrf.mxu0
    %v404 = vadd.f32 %v275, %v403
    %v405 = vpop.f32.mrf.mxu0
    %406 = vmatprep.mubr.f32.mxu0 0.0
    %407 = vmatmul.mubr.f32.gmra.mxu0 %v305
    %v408 = vpop.f32.mrf.mxu0
    %v409 = vadd.f32 %v280, %v408
    %v410 = vpop.f32.mrf.mxu0
    %411 = vdwg.mxu0
    %v412 = vmax.f32 %v374, 0.0
    %v413 = vmax.f32 %v379, 0.0
    %v414 = vmax.f32 %v384, 0.0
    %v415 = vmax.f32 %v389, 0.0
    %v416 = vmax.f32 %v394, 0.0
    %v417 = vmax.f32 %v399, 0.0
    %v418 = vmax.f32 %v404, 0.0
    %v419 = vmax.f32 %v409, 0.0
    %v420 = vld [vmem:[%s5] sm:$0xff]
    %v421 = vld [vmem:[%s6] sm:$0xff]
    %423 = vset.pattern.permute.xlu0 0
    %424 = vperm.xlu0 %423, %v421
    %v425 = vpop.permute.xlu0 %424
    %v428 = vsel %vm282, %v420, 0
    %430 = vmatprep.subr.mxu0 0.0
    %431 = vmatpush1.msra.mxu0 0.0
    %432 = vmatprep.subr.mxu0 0.0
    %433 = vmatpush1.msra.mxu0 0.0
    %434 = vmatprep.subr.mxu0 0.0
    %435 = vmatpush1.msra.mxu0 0.0
    %436 = vmatprep.subr.mxu0 0.0
    %437 = vmatpush1.msra.mxu0 0.0
    %438 = vmatprep.subr.mxu0 0.0
    %439 = vmatpush1.msra.mxu0 0.0
    %440 = vmatprep.subr.mxu0 0.0
    %441 = vmatpush1.msra.mxu0 0.0
    %442 = vmatprep.subr.mxu0 0.0
    %443 = vmatpush1.msra.mxu0 0.0
    %444 = vmatprep.subr.mxu0 0.0
    %445 = vmatpush1.msra.mxu0 0.0
    %446 = vmatprep.subr.mxu0 0.0
    %447 = vmatpush1.msra.mxu0 %v419
    %448 = vmatprep.subr.mxu0 0.0
    %449 = vmatpush1.msra.mxu0 %v418
    %450 = vmatprep.subr.mxu0 0.0
    %451 = vmatpush1.msra.mxu0 %v417
    %452 = vmatprep.subr.mxu0 0.0
    %453 = vmatpush1.msra.mxu0 %v416
    %454 = vmatprep.subr.mxu0 0.0
    %455 = vmatpush1.msra.mxu0 %v415
    %456 = vmatprep.subr.mxu0 0.0
    %457 = vmatpush1.msra.mxu0 %v414
    %458 = vmatprep.subr.mxu0 0.0
    %459 = vmatpush1.msra.mxu0 %v413
    %460 = vmatprep.subr.mxu0 0.0
    %461 = vmatpush1.msra.mxu0 %v412
    %462 = vmatprep.subr.mxu0 0.0
    %463 = vmatpush2.msra.mxu0 0.0
    %464 = vmatprep.subr.mxu0 0.0
    %465 = vmatpush2.msra.mxu0 0.0
    %466 = vmatprep.subr.mxu0 0.0
    %467 = vmatpush2.msra.mxu0 0.0
    %468 = vmatprep.subr.mxu0 0.0
    %469 = vmatpush2.msra.mxu0 0.0
    %470 = vmatprep.subr.mxu0 0.0
    %471 = vmatpush2.msra.mxu0 0.0
    %472 = vmatprep.subr.mxu0 0.0
    %473 = vmatpush2.msra.mxu0 0.0
    %474 = vmatprep.subr.mxu0 0.0
    %475 = vmatpush2.msra.mxu0 0.0
    %476 = vmatprep.subr.mxu0 0.0
    %477 = vmatpush2.msra.mxu0 0.0
    %478 = vmatprep.subr.mxu0 0.0
    %479 = vmatpush2.msra.mxu0 0.0
    %480 = vmatprep.subr.mxu0 0.0
    %481 = vmatpush2.msra.mxu0 0.0
    %482 = vmatprep.subr.mxu0 0.0
    %483 = vmatpush2.msra.mxu0 0.0
    %484 = vmatprep.subr.mxu0 0.0
    %485 = vmatpush2.msra.mxu0 0.0
    %486 = vmatprep.subr.mxu0 0.0
    %487 = vmatpush2.msra.mxu0 0.0
    %488 = vmatprep.subr.mxu0 0.0
    %489 = vmatpush2.msra.mxu0 0.0
    %490 = vmatprep.subr.mxu0 0.0
    %491 = vmatpush2.msra.mxu0 0.0
    %492 = vmatprep.subr.mxu0 0.0
    %493 = vmatpush2.msra.mxu0 0.0
    %494 = vmatprep.mubr.f32.mxu0 0.0
    %495 = vmatmul.mubr.f32.gmra.mxu0 %v428
    %v496 = vpop.f32.mrf.mxu0
    %v497 = vadd.f32 %v425, %v496
    %v498 = vpop.f32.mrf.mxu0
    %499 = vdwg.mxu0
    %500 = vst [vmem:[#allocation2] sm:$0xff] %v497
    // Predicated region
    $region30: #{tpu_custom_call.1} parent=1 // pred_check
      _
    $region31: #{tpu_custom_call.1} parent=1 // pred_check_branch
      %502 = sbr.rel (0) target = $region33
    $region32: #{tpu_custom_call.1} parent=1 // pred_region
      %s504 = ssub.s32 128, 128
      %505 = vsyncadd [#allocation3], %s504
      %s507 = sshll.u32 [#allocation2], 4
      %s508 = int_to_ptr.vmem [resolvable:$true] %s507
      %510 = dma.vmem_to_hbm [thread:$0]  %s508, 128, %s7, [#allocation3]
    $region33: #{tpu_custom_call.1} parent=1 // pred_fallthru
      _
    // Predicated region
    $region34: #{tpu_custom_call.1} parent=1 // pred_check
      _
    $region35: #{tpu_custom_call.1} parent=1 // pred_check_branch
      %512 = sbr.rel (0) target = $region37
    $region36: #{tpu_custom_call.1} parent=1 // pred_region
      %513 = dma.done [#allocation3], 128
    $region37: #{tpu_custom_call.1} parent=1 // pred_fallthru
      _
    %514 = vsyncpa [#allocation3], 1

</llo_original>
